<compile_context>
chip_gen: v7x
topology: tpu7x:2x2x1
jax: 0.10.0
libtpu: 0.0.40
codegen_flags: <defaults>
</compile_context>

<pallas_src>
import functools

import jax
import jax.numpy as jnp
from jax.experimental import pallas as pl
from jax.experimental.pallas import tpu as pltpu


def _round_up(n, m):
    return ((n + m - 1) // m) * m


def _make_kernel(in_dim, out_dim):
    """Build the SimpleNet forward kernel (batch on the lane axis)."""
    use_fma = in_dim <= 8  # tiny contraction -> VPU FMAs beat an MXU matmul

    def kernel(xT_ref, w1T_ref, b1T_ref, w2_ref, b2T_ref, oT_ref):
        xT = xT_ref[...]          # (in_dim, tb)   batch on lanes
        w1T = w1T_ref[...]        # (hid, in_dim)

        # ---- fc1 + bias + ReLU -> h^T (hid, tb) ----
        if use_fma:
            # K = in_dim is tiny: broadcast FMAs on the VPU instead of an
            # (almost 0%-utilized) MXU matmul with its per-tile push/drain.
            h = w1T[:, 0:1] * xT[0:1, :]
            for k in range(1, in_dim):
                h = h + w1T[:, k:k + 1] * xT[k:k + 1, :]
        else:
            h = jnp.dot(w1T, xT, preferred_element_type=jnp.float32)
        h = jnp.maximum(h + b1T_ref[...], 0.0)

        # TODO(synk): nn.Dropout(0.2) is identity in eval/inference mode;
        # training-mode stochastic masking (pltpu.prng_*) intentionally omitted.

        # ---- fc2 + bias + sigmoid -> (out_dim, tb) ----
        if out_dim == 1:
            # VPU multiply + sublane (XLU) reduction; keeps the MXU idle.
            logits = jnp.sum(w2_ref[...] * h, axis=0, keepdims=True)
        else:
            # contract hid (axis 0 of both operands) -> (out_dim, tb)
            logits = jax.lax.dot_general(
                w2_ref[...], h, (((0,), (0,)), ((), ())),
                preferred_element_type=jnp.float32)
        oT_ref[...] = jax.nn.sigmoid(logits + b2T_ref[...])

    return kernel


def prepare_params(w1, b1, w2, b2):
    """One-time layout prep (hoisted out of the per-call forward).

    Takes PyTorch-convention parameters
        w1: (hidden_dim, input_dim)   b1: (hidden_dim,)
        w2: (output_dim, hidden_dim)  b2: (output_dim,)
    and returns the kernel layout
        w1T: (hidden_dim, input_dim)  b1T: (hidden_dim, 1)
        w2k: (hidden_dim, output_dim) b2T: (output_dim, 1)
    """
    w1T = jnp.asarray(w1, jnp.float32)                    # already (hid, in)
    b1T = jnp.asarray(b1, jnp.float32).reshape(-1, 1)     # (hid, 1)
    w2k = jnp.asarray(w2, jnp.float32).T                  # (hid, out)
    b2T = jnp.asarray(b2, jnp.float32).reshape(-1, 1)     # (out, 1)
    return w1T, b1T, w2k, b2T


@functools.partial(jax.jit, static_argnames=("tile_b",))
def simplenet_forward(x, w1T, b1T, w2k, b2T, *, tile_b=4096):
    """x: (B, input_dim) float32 (already squeezed).
    Returns (B, output_dim) float32 in [0, 1]."""
    B, in_dim = x.shape
    hid = w1T.shape[0]
    out_dim = w2k.shape[1]

    # Batch sits on the 128-wide lane axis.
    b128 = _round_up(max(B, 1), 128)
    # >=2 grid steps when the batch allows it so ("parallel",) can shard the
    # batch across v7x's two TensorCores; capped at tile_b (default 4096) to
    # amortize the ~0.35us/step pipeline overhead for large B.
    tb = min(tile_b, max(128, _round_up(pl.cdiv(b128, 2), 128)))
    b_pad = _round_up(B, tb)
    grid = (b_pad // tb,)

    # Per-call data prep is limited to x: transpose + zero-pad the batch.
    # (Padded batch columns produce sigmoid(b2); they are sliced off below.)
    xT = jnp.pad(x.T, ((0, 0), (0, b_pad - B)))            # (in_dim, b_pad)

    kernel = _make_kernel(in_dim, out_dim)

    cost = pl.CostEstimate(
        flops=2 * b_pad * (in_dim * hid + hid * out_dim),
        transcendentals=b_pad * out_dim,                    # sigmoid exp
        bytes_accessed=4 * (in_dim * b_pad + out_dim * b_pad
                            + hid * in_dim + hid + hid * out_dim + out_dim))

    outT = pl.pallas_call(
        kernel,
        out_shape=jax.ShapeDtypeStruct((out_dim, b_pad), jnp.float32),
        grid=grid,
        in_specs=[
            pl.BlockSpec((in_dim, tb), lambda i: (0, i)),    # x^T: batch-tiled
            pl.BlockSpec((hid, in_dim), lambda i: (0, 0)),   # w1^T: resident
            pl.BlockSpec((hid, 1), lambda i: (0, 0)),        # b1: resident
            pl.BlockSpec((hid, out_dim), lambda i: (0, 0)),  # w2: resident
            pl.BlockSpec((out_dim, 1), lambda i: (0, 0)),    # b2: resident
        ],
        out_specs=pl.BlockSpec((out_dim, tb), lambda i: (0, i)),
        compiler_params=pltpu.CompilerParams(
            dimension_semantics=("parallel",)),
        cost_estimate=cost,
    )(xT, w1T, b1T, w2k, b2T)

    # (out_dim, b_pad) -> (B, out_dim); both tiny (no 128-lane padded slab).
    return outT[:, :B].T


def init_params(key, input_dim, hidden_dim, output_dim):
    """PyTorch nn.Linear default init (uniform +-1/sqrt(fan_in)),
    PyTorch-convention shapes: weight (out_features, in_features)."""
    k1, k2, k3, k4 = jax.random.split(key, 4)
    bound1 = 1.0 / jnp.sqrt(input_dim)
    bound2 = 1.0 / jnp.sqrt(hidden_dim)
    w1 = jax.random.uniform(k1, (hidden_dim, input_dim), jnp.float32, -bound1, bound1)
    b1 = jax.random.uniform(k2, (hidden_dim,), jnp.float32, -bound1, bound1)
    w2 = jax.random.uniform(k3, (output_dim, hidden_dim), jnp.float32, -bound2, bound2)
    b2 = jax.random.uniform(k4, (output_dim,), jnp.float32, -bound2, bound2)
    return w1, b1, w2, b2


if __name__ == "__main__":
    # Moon data: 2 input features, 1 sigmoid output.
    batch, input_dim, hidden_dim, output_dim = 8, 2, 32, 1

    key = jax.random.PRNGKey(0)
    kx, kp = jax.random.split(key)

    # Emulate the PyTorch input that needs .squeeze(): [B, 1, input_dim].
    x_raw = jax.random.normal(kx, (batch, 1, input_dim), jnp.float32)
    # axis=1 so a batch of 1 would not also be squeezed away.
    x = jnp.squeeze(x_raw, axis=1)              # -> [B, input_dim]

    w1, b1, w2, b2 = init_params(kp, input_dim, hidden_dim, output_dim)
    # One-time layout prep, outside the per-call hot path.
    params = prepare_params(w1, b1, w2, b2)

    out = simplenet_forward(x, *params)
    out = jax.block_until_ready(out)

    # sanity: shape + closed sigmoid range (f32 sigmoid can saturate to 0/1).
    assert out.shape == (batch, output_dim)
    assert bool(jnp.all((out >= 0.0) & (out <= 1.0)))

    # cross-check against a plain-JAX reference of the PyTorch forward.
    ref = jax.nn.sigmoid(jnp.maximum(x @ w1.T + b1, 0.0) @ w2.T + b2)
    assert bool(jnp.allclose(out, ref, atol=1e-5, rtol=1e-5))

    print("KERNEL_OK")
</pallas_src>

<mosaic_0001>
module attributes {stable_mosaic.version = 11 : i64} {
  func.func @kernel(%arg0: i32, %arg1: memref<2x128xf32, #tpu.memory_space<vmem>>, %arg2: memref<32x2xf32, #tpu.memory_space<vmem>>, %arg3: memref<32x1xf32, #tpu.memory_space<vmem>>, %arg4: memref<32x1xf32, #tpu.memory_space<vmem>>, %arg5: memref<1x1xf32, #tpu.memory_space<vmem>>, %arg6: memref<1x128xf32, #tpu.memory_space<vmem>>) attributes {dimension_semantics = [#tpu.dimension_semantics<parallel>], iteration_bounds = array<i64: 1>, scalar_prefetch = 0 : i64, scratch_operands = 0 : i64, tpu.core_type = #tpu.core_type<tc>, window_params = [{transform_indices = @transform_0, window_bounds = array<i64: 2, 128>}, {pipeline_mode = #tpu.pipeline_mode<synchronous>, transform_indices = @transform_1, window_bounds = array<i64: 32, 2>}, {pipeline_mode = #tpu.pipeline_mode<synchronous>, transform_indices = @transform_2, window_bounds = array<i64: 32, 1>}, {pipeline_mode = #tpu.pipeline_mode<synchronous>, transform_indices = @transform_3, window_bounds = array<i64: 32, 1>}, {pipeline_mode = #tpu.pipeline_mode<synchronous>, transform_indices = @transform_4, window_bounds = array<i64: 1, 1>}, {transform_indices = @transform_5, window_bounds = array<i64: 1, 128>}]} {
    %c0 = arith.constant 0 : index
    %c0_0 = arith.constant 0 : index
    %0 = vector.load %arg1[%c0, %c0_0] : memref<2x128xf32, #tpu.memory_space<vmem>>, vector<2x128xf32>
    %c0_1 = arith.constant 0 : index
    %c0_2 = arith.constant 0 : index
    %1 = vector.load %arg2[%c0_1, %c0_2] : memref<32x2xf32, #tpu.memory_space<vmem>>, vector<32x2xf32>
    %2 = vector.extract_strided_slice %1 {offsets = [0, 0], sizes = [32, 1], strides = [1, 1]} : vector<32x2xf32> to vector<32x1xf32>
    %3 = vector.extract_strided_slice %0 {offsets = [0, 0], sizes = [1, 128], strides = [1, 1]} : vector<2x128xf32> to vector<1x128xf32>
    %4 = vector.broadcast %2 : vector<32x1xf32> to vector<32x128xf32>
    %5 = vector.broadcast %3 : vector<1x128xf32> to vector<32x128xf32>
    %6 = arith.mulf %4, %5 : vector<32x128xf32>
    %7 = vector.extract_strided_slice %1 {offsets = [0, 1], sizes = [32, 1], strides = [1, 1]} : vector<32x2xf32> to vector<32x1xf32>
    %8 = vector.extract_strided_slice %0 {offsets = [1, 0], sizes = [1, 128], strides = [1, 1]} : vector<2x128xf32> to vector<1x128xf32>
    %9 = vector.broadcast %7 : vector<32x1xf32> to vector<32x128xf32>
    %10 = vector.broadcast %8 : vector<1x128xf32> to vector<32x128xf32>
    %11 = arith.mulf %9, %10 : vector<32x128xf32>
    %12 = arith.addf %6, %11 : vector<32x128xf32>
    %c0_3 = arith.constant 0 : index
    %c0_4 = arith.constant 0 : index
    %13 = vector.load %arg3[%c0_3, %c0_4] : memref<32x1xf32, #tpu.memory_space<vmem>>, vector<32x1xf32>
    %14 = vector.broadcast %13 : vector<32x1xf32> to vector<32x128xf32>
    %15 = arith.addf %12, %14 : vector<32x128xf32>
    %cst = arith.constant 0.000000e+00 : f32
    %16 = vector.broadcast %cst : f32 to vector<32x128xf32>
    %17 = arith.maximumf %15, %16 : vector<32x128xf32>
    %c0_5 = arith.constant 0 : index
    %c0_6 = arith.constant 0 : index
    %18 = vector.load %arg4[%c0_5, %c0_6] : memref<32x1xf32, #tpu.memory_space<vmem>>, vector<32x1xf32>
    %19 = vector.broadcast %18 : vector<32x1xf32> to vector<32x128xf32>
    %20 = arith.mulf %19, %17 : vector<32x128xf32>
    %cst_7 = arith.constant dense<0.000000e+00> : vector<128xf32>
    %21 = vector.multi_reduction <add>, %20, %cst_7 [0] : vector<32x128xf32> to vector<128xf32>
    %22 = vector.shape_cast %21 : vector<128xf32> to vector<1x128xf32>
    %c0_8 = arith.constant 0 : index
    %c0_9 = arith.constant 0 : index
    %23 = vector.load %arg5[%c0_8, %c0_9] : memref<1x1xf32, #tpu.memory_space<vmem>>, vector<1x1xf32>
    %24 = vector.broadcast %23 : vector<1x1xf32> to vector<1x128xf32>
    %25 = arith.addf %22, %24 : vector<1x128xf32>
    %26 = arith.negf %25 : vector<1x128xf32>
    %27 = math.exp %26 : vector<1x128xf32>
    %cst_10 = arith.constant 1.000000e+00 : f32
    %28 = vector.broadcast %cst_10 : f32 to vector<1x128xf32>
    %29 = arith.addf %28, %27 : vector<1x128xf32>
    %30 = arith.divf %28, %29 : vector<1x128xf32>
    %c0_11 = arith.constant 0 : index
    %c0_12 = arith.constant 0 : index
    %31 = vector.load %arg6[%c0_11, %c0_12] : memref<1x128xf32, #tpu.memory_space<vmem>>, vector<1x128xf32>
    tpu.vector_store %arg6[%c0_11, %c0_12], %30 {strides = array<i32>} : memref<1x128xf32, #tpu.memory_space<vmem>>, vector<1x128xf32>,
    return
  }
  func.func @transform_0(%arg0: i32) -> (i32, i32) {
    %c0_i32 = arith.constant 0 : i32
    %c0_i32_0 = arith.constant 0 : i32
    return %c0_i32, %arg0 : i32, i32
  }
  func.func @transform_1(%arg0: i32) -> (i32, i32) {
    %c0_i32 = arith.constant 0 : i32
    %c0_i32_0 = arith.constant 0 : i32
    %c0_i32_1 = arith.constant 0 : i32
    return %c0_i32, %c0_i32_0 : i32, i32
  }
  func.func @transform_2(%arg0: i32) -> (i32, i32) {
    %c0_i32 = arith.constant 0 : i32
    %c0_i32_0 = arith.constant 0 : i32
    %c0_i32_1 = arith.constant 0 : i32
    return %c0_i32, %c0_i32_0 : i32, i32
  }
  func.func @transform_3(%arg0: i32) -> (i32, i32) {
    %c0_i32 = arith.constant 0 : i32
    %c0_i32_0 = arith.constant 0 : i32
    %c0_i32_1 = arith.constant 0 : i32
    return %c0_i32, %c0_i32_0 : i32, i32
  }
  func.func @transform_4(%arg0: i32) -> (i32, i32) {
    %c0_i32 = arith.constant 0 : i32
    %c0_i32_0 = arith.constant 0 : i32
    %c0_i32_1 = arith.constant 0 : i32
    return %c0_i32, %c0_i32_0 : i32, i32
  }
  func.func @transform_5(%arg0: i32) -> (i32, i32) {
    %c0_i32 = arith.constant 0 : i32
    %c0_i32_0 = arith.constant 0 : i32
    return %c0_i32, %arg0 : i32, i32
  }
}

</mosaic_0001>

<llo_original>
// kernel: simplenet_forward.1
$region0: #{simplenet_forward.1}
  #allocation0 [shape = 'u32[]', space=smem, size = 0x4, offset = 0x4, fixed_abs, tag = 'smem constant byte address 0x4 - core index']
  #allocation1 [shape = 'u32[144,128]{1,0:T(1,128)}', space=vmem, size = 0x12000, scoped, tag = 'internal scratch']
  #allocation2 [shape = 'f32[1,1]{1,0:T(1,128)S(1)}', space=vmem, size = 0x200, scoped, tag = 'scoped memory for simplenet_forward.1']
  %s0 = inlined_call_operand.vmem [shape: f32[2,128], index: 0, kind: input, shape index: {}]
  %s1 = inlined_call_operand.vmem [shape: f32[32,2], index: 1, kind: input, shape index: {}]
  %s2 = inlined_call_operand.vmem [shape: f32[32,1], index: 2, kind: input, shape index: {}]
  %s3 = inlined_call_operand.vmem [shape: f32[32,1], index: 3, kind: input, shape index: {}]
  %s4 = inlined_call_operand.<no memory space> [shape: f32[1,1], index: 4, kind: input, shape index: {}]
  %s5 = inlined_call_operand.vmem [shape: f32[1,128], index: 5, kind: output, shape index: {}]
  %s6 = sld [smem:[#allocation0]]
  $region30: #{simplenet_forward.1} parent=0
    _
  %s8 = ssub.s32 1, %s6
  %s9 = scalar_select 0, %s8, %s6
  %v10 = vstv %s4
  %11 = vst [vmem:[#allocation2] sm:$0x1] %v10
  // Predicated region
  $region2: #{simplenet_forward.1} parent=0 // pred_check
    _
  $region3: #{simplenet_forward.1} parent=0 // pred_check_branch
    %13 = sbr.rel (0) target = $region5
  $region4: #{simplenet_forward.1} parent=0 // pred_region
    _
  $region5: #{simplenet_forward.1} parent=0 // pred_fallthru
    _
  // Predicated region
  $region6: #{simplenet_forward.1} parent=0 // pred_check
    _
  $region7: #{simplenet_forward.1} parent=0 // pred_check_branch
    %15 = sbr.rel (0) target = $region9
  $region8: #{simplenet_forward.1} parent=0 // pred_region
    _
  $region9: #{simplenet_forward.1} parent=0 // pred_fallthru
    _
  // Predicated region
  $region10: #{simplenet_forward.1} parent=0 // pred_check
    _
  $region11: #{simplenet_forward.1} parent=0 // pred_check_branch
    %17 = sbr.rel (0) target = $region13
  $region12: #{simplenet_forward.1} parent=0 // pred_region
    _
  $region13: #{simplenet_forward.1} parent=0 // pred_fallthru
    _
  // Predicated region
  $region14: #{simplenet_forward.1} parent=0 // pred_check
    _
  $region15: #{simplenet_forward.1} parent=0 // pred_check_branch
    %19 = sbr.rel (0) target = $region17
  $region16: #{simplenet_forward.1} parent=0 // pred_region
    _
  $region17: #{simplenet_forward.1} parent=0 // pred_fallthru
    _
  // Predicated region
  $region18: #{simplenet_forward.1} parent=0 // pred_check
    _
  $region19: #{simplenet_forward.1} parent=0 // pred_check_branch
    %21 = sbr.rel (0) target = $region21
  $region20: #{simplenet_forward.1} parent=0 // pred_region
    _
  $region21: #{simplenet_forward.1} parent=0 // pred_fallthru
    _
  %v22 = vld [vmem:[%s0] sm:$0x3]
  %v23 = vld [vmem:[%s1] sm:$0xff]
  %v24 = vld [vmem:[%s1 + $0x8] sm:$0xff]
  %v25 = vld [vmem:[%s1 + $0x10] sm:$0xff]
  %v26 = vld [vmem:[%s1 + $0x18] sm:$0xff]
  %28 = vset.pattern.permute.xlu0 0
  %29 = vperm.xlu0 %28, %v23
  %v30 = vpop.permute.xlu0 %29
  %33 = vset.pattern.permute.xlu0 0
  %34 = vperm.xlu0 %33, %v24
  %v35 = vpop.permute.xlu0 %34
  %38 = vset.pattern.permute.xlu0 0
  %39 = vperm.xlu0 %38, %v25
  %v40 = vpop.permute.xlu0 %39
  %43 = vset.pattern.permute.xlu0 0
  %44 = vperm.xlu0 %43, %v26
  %v45 = vpop.permute.xlu0 %44
  %v47 = vlaneseq
  %v48 = vshrl.u32 %v47, 7
  %v49 = vsub.s32 0, %v48
  %v50 = vrot.slane %v22, %v49
  %v51 = vmul.f32 %v30, %v50
  %v52 = vmul.f32 %v35, %v50
  %v53 = vmul.f32 %v40, %v50
  %v54 = vmul.f32 %v45, %v50
  %55 = vset.pattern.permute.xlu0 1
  %56 = vperm.xlu0 %55, %v23
  %v57 = vpop.permute.xlu0 %56
  %59 = vset.pattern.permute.xlu0 1
  %60 = vperm.xlu0 %59, %v24
  %v61 = vpop.permute.xlu0 %60
  %63 = vset.pattern.permute.xlu0 1
  %64 = vperm.xlu0 %63, %v25
  %v65 = vpop.permute.xlu0 %64
  %67 = vset.pattern.permute.xlu0 1
  %68 = vperm.xlu0 %67, %v26
  %v69 = vpop.permute.xlu0 %68
  %v71 = vlaneseq
  %v72 = vshrl.u32 %v71, 7
  %v73 = vsub.s32 1, %v72
  %v74 = vrot.slane %v22, %v73
  %v75 = vmul.f32 %v57, %v74
  %v76 = vmul.f32 %v61, %v74
  %v77 = vmul.f32 %v65, %v74
  %v78 = vmul.f32 %v69, %v74
  %v79 = vadd.f32 %v51, %v75
  %v80 = vadd.f32 %v52, %v76
  %v81 = vadd.f32 %v53, %v77
  %v82 = vadd.f32 %v54, %v78
  %v83 = vld [vmem:[%s2] sm:$0xff]
  %v84 = vld [vmem:[%s2 + $0x8] sm:$0xff]
  %v85 = vld [vmem:[%s2 + $0x10] sm:$0xff]
  %v86 = vld [vmem:[%s2 + $0x18] sm:$0xff]
  %88 = vset.pattern.permute.xlu0 0
  %89 = vperm.xlu0 %88, %v83
  %v90 = vpop.permute.xlu0 %89
  %93 = vset.pattern.permute.xlu0 0
  %94 = vperm.xlu0 %93, %v84
  %v95 = vpop.permute.xlu0 %94
  %98 = vset.pattern.permute.xlu0 0
  %99 = vperm.xlu0 %98, %v85
  %v100 = vpop.permute.xlu0 %99
  %103 = vset.pattern.permute.xlu0 0
  %104 = vperm.xlu0 %103, %v86
  %v105 = vpop.permute.xlu0 %104
  %v107 = vadd.f32 %v79, %v90
  %v108 = vadd.f32 %v80, %v95
  %v109 = vadd.f32 %v81, %v100
  %v110 = vadd.f32 %v82, %v105
  %v111 = vmax.f32 %v107, 0.0
  %v112 = vmax.f32 %v108, 0.0
  %v113 = vmax.f32 %v109, 0.0
  %v114 = vmax.f32 %v110, 0.0
  %v115 = vld [vmem:[%s3] sm:$0xff]
  %v116 = vld [vmem:[%s3 + $0x8] sm:$0xff]
  %v117 = vld [vmem:[%s3 + $0x10] sm:$0xff]
  %v118 = vld [vmem:[%s3 + $0x18] sm:$0xff]
  %120 = vset.pattern.permute.xlu0 0
  %121 = vperm.xlu0 %120, %v115
  %v122 = vpop.permute.xlu0 %121
  %125 = vset.pattern.permute.xlu0 0
  %126 = vperm.xlu0 %125, %v116
  %v127 = vpop.permute.xlu0 %126
  %130 = vset.pattern.permute.xlu0 0
  %131 = vperm.xlu0 %130, %v117
  %v132 = vpop.permute.xlu0 %131
  %135 = vset.pattern.permute.xlu0 0
  %136 = vperm.xlu0 %135, %v118
  %v137 = vpop.permute.xlu0 %136
  %v139 = vmul.f32 %v122, %v111
  %v140 = vmul.f32 %v127, %v112
  %v141 = vmul.f32 %v132, %v113
  %v142 = vmul.f32 %v137, %v114
  %v143 = vadd.f32 %v139, %v140
  %v144 = vadd.f32 %v143, %v141
  %v145 = vadd.f32 %v144, %v142
  %v146 = vrot.slane %v145, 4
  %v147 = vadd.f32 %v145, %v146
  %v148 = vrot.slane %v147, 2
  %v149 = vadd.f32 %v147, %v148
  %v150 = vrot.slane %v149, 1
  %v151 = vadd.f32 %v149, %v150
  %v152 = vld [vmem:[#allocation2] sm:$0x1]
  %154 = vset.pattern.permute.xlu0 0
  %155 = vperm.xlu0 %154, %v152
  %v156 = vpop.permute.xlu0 %155
  %v158 = vlaneseq
  %v159 = vshrl.u32 %v158, 7
  %v160 = vsub.s32 0, %v159
  %v161 = vrot.slane %v156, %v160
  %v162 = vadd.f32 %v151, %v161
  %v163 = vxor.u32 %v162, 2147483648
  %v164 = vmul.f32 %v163, 1.442695
  %v165 = vpow.pop %v164
  %v166 = vadd.f32 %v165, 1.0
  %v167 = vrcp.pop %v166
  %v168 = vmul.f32 1.0, %v167
  %169 = vst [vmem:[%s5] sm:$0x1] %v168
  // Predicated region
  $region22: #{simplenet_forward.1} parent=0 // pred_check
    _
  $region23: #{simplenet_forward.1} parent=0 // pred_check_branch
    %171 = sbr.rel (0) target = $region25
  $region24: #{simplenet_forward.1} parent=0 // pred_region
    _
  $region25: #{simplenet_forward.1} parent=0 // pred_fallthru
    _
  // Predicated region
  $region26: #{simplenet_forward.1} parent=0 // pred_check
    _
  $region27: #{simplenet_forward.1} parent=0 // pred_check_branch
    %173 = sbr.rel (0) target = $region29
  $region28: #{simplenet_forward.1} parent=0 // pred_region
    _
  $region29: #{simplenet_forward.1} parent=0 // pred_fallthru
    _

</llo_original>
